<compile_context>
chip_gen: v7x
topology: tpu7x:2x2x1
jax: 0.10.0
libtpu: 0.0.40
codegen_flags: <defaults>
</compile_context>

<pallas_src>
import functools

import jax
import jax.numpy as jnp
from jax import lax
from jax.experimental import pallas as pl
from jax.experimental.pallas import tpu as pltpu


# ---------------------------------------------------------------------------
# Pallas kernels
# ---------------------------------------------------------------------------
def _mm_kernel(*refs, n_in, act, has_res, col_slices):
    """out = [SiLU]( sum_t x_t[:, cols_t] @ w_t + bias [+ residual] )."""
    out_ref = refs[-1]
    z = None
    for t in range(n_in):
        x_ref = refs[t]
        if col_slices[t] is None:
            x = x_ref[...]
        else:
            s0, sz = col_slices[t]
            x = x_ref[:, s0:s0 + sz]
        part = jnp.dot(x, refs[n_in + t][...], preferred_element_type=jnp.float32)
        z = part if z is None else z + part
    z = z + refs[2 * n_in][...]                       # bias (1, Cout)
    if has_res:
        z = z + refs[2 * n_in + 1][...]
    if act:
        z = z * (1.0 / (1.0 + jnp.exp(-z)))           # SiLU (exp/recip -> EUP)
    out_ref[...] = z.astype(out_ref.dtype)


def attn_kernel(qkv_ref, o_ref, v_ref, *, num_heads, key_dim, head_dim, scale):
    """Per-batch multi-head attention, channels-last.

    qkv block: (1, Nseq, nh*(2*kd+hd)), per head channels laid out [q|k|v].
    Outputs: attn result (1, Nseq, nh*hd) and the v slice (same layout) so the
    wrapper never has to re-gather v from qkv in HBM.
    """
    qkv = qkv_ref[...]                                # (1, Nseq, Ctot)
    for h in range(num_heads):
        base = h * (2 * key_dim + head_dim)
        q = qkv[0, :, base:base + key_dim]                                # (Nseq, kd)
        k = qkv[0, :, base + key_dim:base + 2 * key_dim]                  # (Nseq, kd)
        v = qkv[0, :, base + 2 * key_dim:base + 2 * key_dim + head_dim]   # (Nseq, hd)
        s = lax.dot_general(q, k, (((1,), (1,)), ((), ())),
                            preferred_element_type=jnp.float32) * scale   # (Nseq, Nseq)
        s = s - jnp.max(s, axis=-1, keepdims=True)
        p = jnp.exp(s)
        p = p / jnp.sum(p, axis=-1, keepdims=True)
        out = jnp.dot(p, v, preferred_element_type=jnp.float32)           # (Nseq, hd)
        o_ref[:, :, h * head_dim:(h + 1) * head_dim] = out[None].astype(o_ref.dtype)
        v_ref[:, :, h * head_dim:(h + 1) * head_dim] = v[None].astype(v_ref.dtype)


def pe_dw_kernel(vpad_ref, attn_ref, dw_ref, o_ref, *, H, W):
    """out = attn_out + depthwise3x3(v)   (pe's 1x1 branch is folded into proj).

    vpad: (1, H+2, W+2, C) zero-padded v; taps read as ref-window slices.
    """
    dw = dw_ref[...]                                  # (9, C)
    acc = attn_ref[...].astype(jnp.float32)           # (1, H, W, C)
    for kh in range(3):
        for kw in range(3):
            tap = dw[kh * 3 + kw:kh * 3 + kw + 1, :]  # (1, C) broadcast over (1,H,W,C)
            acc = acc + vpad_ref[:, kh:kh + H, kw:kw + W, :] * tap
    o_ref[...] = acc.astype(o_ref.dtype)


# ---------------------------------------------------------------------------
# pallas_call wrappers
# ---------------------------------------------------------------------------
_PAR1 = pltpu.CompilerParams(dimension_semantics=("parallel",))


def fused_matmul(xs, ws, bias, *, residual=None, act=False, col_slices=None, tm=256):
    n_in = len(xs)
    M = xs[0].shape[0]
    Cout = ws[0].shape[1]
    if col_slices is None:
        col_slices = [None] * n_in
    tm = min(tm, M)
    grid = (pl.cdiv(M, tm),)

    in_specs, args = [], []
    for x in xs:
        in_specs.append(pl.BlockSpec((tm, x.shape[1]), lambda i: (i, 0)))
        args.append(x)
    for w in ws:
        in_specs.append(pl.BlockSpec(w.shape, lambda i: (0, 0)))
        args.append(w)
    in_specs.append(pl.BlockSpec((1, Cout), lambda i: (0, 0)))
    args.append(bias.reshape(1, Cout))
    if residual is not None:
        in_specs.append(pl.BlockSpec((tm, Cout), lambda i: (i, 0)))
        args.append(residual)

    kern = functools.partial(_mm_kernel, n_in=n_in, act=act,
                             has_res=residual is not None,
                             col_slices=tuple(col_slices))
    return pl.pallas_call(
        kern,
        out_shape=jax.ShapeDtypeStruct((M, Cout), jnp.float32),
        grid=grid,
        in_specs=in_specs,
        out_specs=pl.BlockSpec((tm, Cout), lambda i: (i, 0)),
        compiler_params=_PAR1,
    )(*args)


def attention_call(qkv3, *, num_heads, key_dim, head_dim, scale):
    N, Nseq, Ctot = qkv3.shape
    C = num_heads * head_dim
    kern = functools.partial(attn_kernel, num_heads=num_heads, key_dim=key_dim,
                             head_dim=head_dim, scale=scale)
    return pl.pallas_call(
        kern,
        out_shape=(jax.ShapeDtypeStruct((N, Nseq, C), jnp.float32),
                   jax.ShapeDtypeStruct((N, Nseq, C), jnp.float32)),
        grid=(N,),
        in_specs=[pl.BlockSpec((1, Nseq, Ctot), lambda b: (b, 0, 0))],
        out_specs=(pl.BlockSpec((1, Nseq, C), lambda b: (b, 0, 0)),
                   pl.BlockSpec((1, Nseq, C), lambda b: (b, 0, 0))),
        compiler_params=_PAR1,
    )(qkv3)


def pe_dw_call(vpad, attn4d, dw9):
    N, Hp, Wp, C = vpad.shape
    H, W = Hp - 2, Wp - 2
    kern = functools.partial(pe_dw_kernel, H=H, W=W)
    return pl.pallas_call(
        kern,
        out_shape=jax.ShapeDtypeStruct((N, H, W, C), jnp.float32),
        grid=(N,),
        in_specs=[pl.BlockSpec((1, Hp, Wp, C), lambda b: (b, 0, 0, 0)),
                  pl.BlockSpec((1, H, W, C), lambda b: (b, 0, 0, 0)),
                  pl.BlockSpec((9, C), lambda b: (0, 0))],
        out_specs=pl.BlockSpec((1, H, W, C), lambda b: (b, 0, 0, 0)),
        compiler_params=_PAR1,
    )(vpad, attn4d, dw9)


# ---------------------------------------------------------------------------
# Parameter fusion (glue, plain JAX)
# ---------------------------------------------------------------------------
def fuse_bn(bn, eps=1e-5):
    gamma, beta, mean, var = bn
    scale = gamma / jnp.sqrt(var + eps)
    return scale, beta - mean * scale


def fuse_pw_block(p):
    """Fold a RepVGG 1x1 Conv block (conv+BN, 1x1+BN, optional dw 1x1+BN) -> (Cin,Cout), (Cout,)."""
    s1, b1 = fuse_bn(p['bn'])
    s2, b2 = fuse_bn(p['c2_bn'])
    Wt = s1[:, None] * p['conv_w'][:, :, 0, 0] + s2[:, None] * p['c2_w'][:, :, 0, 0]
    bt = b1 + b2
    if 'c3_w' in p:                                   # depthwise 1x1 branch (Cin == Cout)
        s3, b3 = fuse_bn(p['c3_bn'])
        Wt = Wt + jnp.diag(s3 * p['c3_w'][:, 0, 0, 0])
        bt = bt + b3
    return jnp.transpose(Wt), bt                      # (in, out) layout


def fuse_dw_block(p):
    """Fold pe = Conv(C, C, 3, g=C): two dw 3x3 branches + one dense 1x1 branch."""
    sd, bd = fuse_bn(p['bn'])
    s3, b3 = fuse_bn(p['c3_bn'])
    s2, b2 = fuse_bn(p['c2_bn'])
    C = p['conv_w'].shape[0]
    dw = sd[:, None, None] * p['conv_w'][:, 0] + s3[:, None, None] * p['c3_w'][:, 0]  # (C,3,3)
    dw9 = jnp.transpose(dw, (1, 2, 0)).reshape(9, C)
    pw = jnp.transpose(s2[:, None] * p['c2_w'][:, :, 0, 0])                           # (in, out)
    return dw9, pw, bd + b3 + b2


# ---------------------------------------------------------------------------
# PSA forward (Pallas)
# ---------------------------------------------------------------------------
def psa_forward(x, P, *, c, num_heads, key_dim, head_dim):
    N, C1, H, W = x.shape
    M = N * H * W
    Nseq = H * W
    scale = float(key_dim) ** -0.5

    W_cv1, b_cv1 = fuse_pw_block(P['cv1'])
    W_qkv, b_qkv = fuse_pw_block(P['qkv'])
    W_proj, b_proj = fuse_pw_block(P['proj'])
    W_f1, b_f1 = fuse_pw_block(P['ffn1'])
    W_f2, b_f2 = fuse_pw_block(P['ffn2'])
    W_cv2, b_cv2 = fuse_pw_block(P['cv2'])
    dw_pe, pw_pe, b_pe = fuse_dw_block(P['pe'])

    # Fold pe's 1x1 branch + bias through proj:  (.. + v@PW + b_pe) @ Wp == .. + v@(PW@Wp) + b_pe@Wp
    W_pe_proj = jnp.dot(pw_pe, W_proj, precision=lax.Precision.HIGHEST)
    b_proj_eff = b_proj + jnp.dot(b_pe, W_proj, precision=lax.Precision.HIGHEST)

    x_cl = jnp.transpose(x, (0, 2, 3, 1)).reshape(M, C1)       # NCHW -> channels-last rows

    # cv1 (SiLU of fused 3-branch 1x1); a|b halves stay packed in one buffer.
    y = fused_matmul([x_cl], [W_cv1], b_cv1, act=True)          # (M, 2c)
    b0 = y[:, c:]                                               # (M, c)

    # Attention: qkv matmul -> per-batch softmax attention (also emits v, channels-last).
    qkv = fused_matmul([b0], [W_qkv], b_qkv, act=False)         # (M, h)
    attn_out, v_cl = attention_call(qkv.reshape(N, Nseq, -1),
                                    num_heads=num_heads, key_dim=key_dim,
                                    head_dim=head_dim, scale=scale)

    # pe depthwise 3x3 (+ attn_out), halo provided by a 1-pixel zero pad of the small v tensor.
    v_img = v_cl.reshape(N, H, W, c)
    vpad = jnp.pad(v_img, ((0, 0), (1, 1), (1, 1), (0, 0)))
    t = pe_dw_call(vpad, attn_out.reshape(N, H, W, c), dw_pe)   # attn_out + DW3x3(v)
    t2d = t.reshape(M, c)
    v2d = v_cl.reshape(M, c)

    # b = b + proj(attn_out + pe(v))   [pe 1x1 branch folded -> second MXU operand]
    b1 = fused_matmul([t2d, v2d], [W_proj, W_pe_proj], b_proj_eff,
                      residual=b0, act=False)
    # b = b + ffn(b)
    f1 = fused_matmul([b1], [W_f1], b_f1, act=True)
    b2 = fused_matmul([f1], [W_f2], b_f2, residual=b1, act=False)

    # cv2(cat(a, b)) without materializing the concat: split cv2's weight rows,
    # read `a` as the first c columns of y inside the kernel.
    out2d = fused_matmul([y, b2], [W_cv2[:c], W_cv2[c:]], b_cv2,
                         col_slices=[(0, c), None], act=True)   # (M, C1)
    return jnp.transpose(out2d.reshape(N, H, W, C1), (0, 3, 1, 2))


# ---------------------------------------------------------------------------
# Plain-JAX reference (mirrors the PyTorch module, eval-mode BN)
# ---------------------------------------------------------------------------
def _ref_conv2d(x, w, pad, groups):
    return lax.conv_general_dilated(
        x, w, window_strides=(1, 1), padding=((pad, pad), (pad, pad)),
        dimension_numbers=('NCHW', 'OIHW', 'NCHW'),
        feature_group_count=groups, precision=lax.Precision.HIGHEST)


def _ref_bn(x, bn, eps=1e-5):
    gamma, beta, mean, var = bn
    s = gamma / jnp.sqrt(var + eps)
    return x * s[None, :, None, None] + (beta - mean * s)[None, :, None, None]


def ref_conv_block(x, p, *, k, g, act):
    pad = k // 2
    out = _ref_bn(_ref_conv2d(x, p['conv_w'], pad, g), p['bn'])
    out = out + _ref_bn(_ref_conv2d(x, p['c2_w'], 0, 1), p['c2_bn'])
    if 'c3_w' in p:
        out = out + _ref_bn(_ref_conv2d(x, p['c3_w'], pad, p['c3_w'].shape[0]), p['c3_bn'])
    if act:
        out = out * jax.nn.sigmoid(out)
    return out


def ref_attention(x, P, *, num_heads, key_dim, head_dim):
    B, C, H, W = x.shape
    Nseq = H * W
    scale = float(key_dim) ** -0.5
    qkv = ref_conv_block(x, P['qkv'], k=1, g=1, act=False)
    qkv = qkv.reshape(B, num_heads, 2 * key_dim + head_dim, Nseq)
    q = qkv[:, :, :key_dim]
    k = qkv[:, :, key_dim:2 * key_dim]
    v = qkv[:, :, 2 * key_dim:]
    attn = jnp.einsum('bhdi,bhdj->bhij', q, k, precision=lax.Precision.HIGHEST) * scale
    attn = jax.nn.softmax(attn, axis=-1)
    o = jnp.einsum('bhej,bhij->bhei', v, attn, precision=lax.Precision.HIGHEST)
    o = o.reshape(B, C, H, W)
    o = o + ref_conv_block(v.reshape(B, C, H, W), P['pe'], k=3, g=C, act=False)
    return ref_conv_block(o, P['proj'], k=1, g=1, act=False)


def ref_psa(x, P, *, c, num_heads, key_dim, head_dim):
    y = ref_conv_block(x, P['cv1'], k=1, g=1, act=True)
    a, b = y[:, :c], y[:, c:]
    b = b + ref_attention(b, P, num_heads=num_heads, key_dim=key_dim, head_dim=head_dim)
    f = ref_conv_block(b, P['ffn1'], k=1, g=1, act=True)
    f = ref_conv_block(f, P['ffn2'], k=1, g=1, act=False)
    b = b + f
    return ref_conv_block(jnp.concatenate([a, b], axis=1), P['cv2'], k=1, g=1, act=True)


# ---------------------------------------------------------------------------
# Deterministic parameter init + test
# ---------------------------------------------------------------------------
def bn_params(key, ch):
    k1, k2, k3, k4 = jax.random.split(key, 4)
    gamma = 1.0 + 0.1 * jax.random.normal(k1, (ch,), jnp.float32)
    beta = 0.1 * jax.random.normal(k2, (ch,), jnp.float32)
    mean = 0.1 * jax.random.normal(k3, (ch,), jnp.float32)
    var = jax.random.uniform(k4, (ch,), jnp.float32, minval=0.5, maxval=1.5)
    return (gamma, beta, mean, var)


def make_conv_block_params(key, cin, cout, k, g):
    ks = jax.random.split(key, 6)
    nrm = lambda kk, shp: 0.1 * jax.random.normal(kk, shp, jnp.float32)
    p = {
        'conv_w': nrm(ks[0], (cout, cin // g, k, k)),
        'bn': bn_params(ks[1], cout),
        'c2_w': nrm(ks[2], (cout, cin, 1, 1)),
        'c2_bn': bn_params(ks[3], cout),
    }
    if cin == cout:                                    # t3 branch in the module
        p['c3_w'] = nrm(ks[4], (cout, cin // cout, k, k))
        p['c3_bn'] = bn_params(ks[5], cout)
    return p


if __name__ == "__main__":
    # PSA requires c1 == c2 and num_heads = (c1//2)//64 >= 1  ->  smallest clean config: c1 = 128.
    N, C1, H, W = 2, 128, 16, 16
    c = C1 // 2                            # e = 0.5
    num_heads = c // 64                    # Attention(self.c, num_heads=self.c // 64)
    head_dim = c // num_heads
    key_dim = head_dim // 2                # attn_ratio = 0.5
    h_qkv = c + 2 * num_heads * key_dim

    root = jax.random.PRNGKey(0)
    kx, k1, k2, k3, k4, k5, k6, k7 = jax.random.split(root, 8)
    x = jax.random.normal(kx, (N, C1, H, W), jnp.float32)
    P = {
        'cv1':  make_conv_block_params(k1, C1, 2 * c, 1, 1),
        'qkv':  make_conv_block_params(k2, c, h_qkv, 1, 1),
        'pe':   make_conv_block_params(k3, c, c, 3, c),
        'proj': make_conv_block_params(k4, c, c, 1, 1),
        'ffn1': make_conv_block_params(k5, c, 2 * c, 1, 1),
        'ffn2': make_conv_block_params(k6, 2 * c, c, 1, 1),
        'cv2':  make_conv_block_params(k7, 2 * c, C1, 1, 1),
    }

    out = psa_forward(x, P, c=c, num_heads=num_heads, key_dim=key_dim, head_dim=head_dim)
    out = jax.block_until_ready(out)

    ref = ref_psa(x, P, c=c, num_heads=num_heads, key_dim=key_dim, head_dim=head_dim)
    assert out.shape == (N, C1, H, W), out.shape
    max_err = float(jnp.max(jnp.abs(out - ref)))
    assert jnp.allclose(out, ref, atol=2e-3, rtol=2e-3), max_err
    print("KERNEL_OK")
</pallas_src>

<mosaic_0001>
module attributes {stable_mosaic.version = 11 : i64} {
  func.func @_mm_kernel(%arg0: i32, %arg1: memref<256x128xf32, #tpu.memory_space<vmem>>, %arg2: memref<128x128xf32, #tpu.memory_space<vmem>>, %arg3: memref<1x128xf32, #tpu.memory_space<vmem>>, %arg4: memref<256x128xf32, #tpu.memory_space<vmem>>) attributes {dimension_semantics = [#tpu.dimension_semantics<parallel>], iteration_bounds = array<i64: 2>, scalar_prefetch = 0 : i64, scratch_operands = 0 : i64, tpu.core_type = #tpu.core_type<tc>, window_params = [{transform_indices = @transform_0, window_bounds = array<i64: 256, 128>}, {pipeline_mode = #tpu.pipeline_mode<synchronous>, transform_indices = @transform_1, window_bounds = array<i64: 128, 128>}, {pipeline_mode = #tpu.pipeline_mode<synchronous>, transform_indices = @transform_2, window_bounds = array<i64: 1, 128>}, {transform_indices = @transform_3, window_bounds = array<i64: 256, 128>}]} {
    %c0 = arith.constant 0 : index
    %c0_0 = arith.constant 0 : index
    %0 = vector.load %arg1[%c0, %c0_0] : memref<256x128xf32, #tpu.memory_space<vmem>>, vector<256x128xf32>
    %c0_1 = arith.constant 0 : index
    %c0_2 = arith.constant 0 : index
    %1 = vector.load %arg2[%c0_1, %c0_2] : memref<128x128xf32, #tpu.memory_space<vmem>>, vector<128x128xf32>
    %cst = arith.constant dense<0.000000e+00> : vector<256x128xf32>
    %2 = tpu.matmul %0, %1, %cst {dimension_numbers = #tpu.dot_dimension_numbers<[1], [0], [0], [1], [0, 0, 1, 1], [], []>} : vector<256x128xf32>, vector<128x128xf32>, vector<256x128xf32> -> vector<256x128xf32>
    %c0_3 = arith.constant 0 : index
    %c0_4 = arith.constant 0 : index
    %3 = vector.load %arg3[%c0_3, %c0_4] : memref<1x128xf32, #tpu.memory_space<vmem>>, vector<1x128xf32>
    %4 = vector.broadcast %3 : vector<1x128xf32> to vector<256x128xf32>
    %5 = arith.addf %2, %4 : vector<256x128xf32>
    %cst_5 = arith.constant 0.000000e+00 : f32
    %6 = vector.broadcast %cst_5 : f32 to vector<256x128xf32>
    %7 = arith.subf %6, %5 : vector<256x128xf32>
    %8 = math.exp %7 : vector<256x128xf32>
    %cst_6 = arith.constant 1.000000e+00 : f32
    %9 = vector.broadcast %cst_6 : f32 to vector<256x128xf32>
    %10 = arith.addf %9, %8 : vector<256x128xf32>
    %cst_7 = arith.constant 1.000000e+00 : f32
    %11 = vector.broadcast %cst_7 : f32 to vector<256x128xf32>
    %12 = arith.divf %11, %10 : vector<256x128xf32>
    %13 = arith.mulf %5, %12 : vector<256x128xf32>
    %c0_8 = arith.constant 0 : index
    %c0_9 = arith.constant 0 : index
    %14 = vector.load %arg4[%c0_8, %c0_9] : memref<256x128xf32, #tpu.memory_space<vmem>>, vector<256x128xf32>
    tpu.vector_store %arg4[%c0_8, %c0_9], %13 {strides = array<i32>} : memref<256x128xf32, #tpu.memory_space<vmem>>, vector<256x128xf32>,
    return
  }
  func.func @transform_0(%arg0: i32) -> (i32, i32) {
    %c0_i32 = arith.constant 0 : i32
    %c0_i32_0 = arith.constant 0 : i32
    return %arg0, %c0_i32 : i32, i32
  }
  func.func @transform_1(%arg0: i32) -> (i32, i32) {
    %c0_i32 = arith.constant 0 : i32
    %c0_i32_0 = arith.constant 0 : i32
    %c0_i32_1 = arith.constant 0 : i32
    return %c0_i32, %c0_i32_0 : i32, i32
  }
  func.func @transform_2(%arg0: i32) -> (i32, i32) {
    %c0_i32 = arith.constant 0 : i32
    %c0_i32_0 = arith.constant 0 : i32
    %c0_i32_1 = arith.constant 0 : i32
    return %c0_i32, %c0_i32_0 : i32, i32
  }
  func.func @transform_3(%arg0: i32) -> (i32, i32) {
    %c0_i32 = arith.constant 0 : i32
    %c0_i32_0 = arith.constant 0 : i32
    return %arg0, %c0_i32 : i32, i32
  }
}

</mosaic_0001>

<llo_original>
// kernel: tpu_custom_call.1
$region0: #{tpu_custom_call.1}
  #allocation0 [shape = 'u32[]', space=smem, size = 0x4, offset = 0x4, fixed_abs, tag = 'smem constant byte address 0x4 - core index']
  #allocation1 [shape = 'u32[144,128]{1,0:T(1,128)}', space=vmem, size = 0x12000, scoped, tag = 'internal scratch']
  %s0 = inlined_call_operand.hbm [shape: f32[512,128], index: 0, kind: input, shape index: {}]
  %s1 = inlined_call_operand.hbm [shape: f32[128,128], index: 1, kind: input, shape index: {}]
  %s2 = inlined_call_operand.vmem [shape: f32[1,128], index: 2, kind: input, shape index: {}]
  %s3 = inlined_call_operand.hbm [shape: f32[512,128], index: 3, kind: output, shape index: {}]
  %s4 = sld [smem:[#allocation0]]
  $region53: #{tpu_custom_call.1} parent=0
    _
  %s6 = ssub.s32 1, %s4
  %s7 = scalar_select 0, %s6, %s4
  $region1: #{tpu_custom_call.1} parent=0
    #allocation2 [shape = 'u8[262144]{0}', space=vmem, size = 0x40000, scoped, tag = 'input window, operand 0']
    #allocation3 [shape = 's32[2]{0}', space=sflag, size = 0x8, scoped, tag = 'scoped memory for tpu_custom_call.1']
    #allocation4 [shape = 's32[2]{0}', space=sflag, size = 0x8, scoped, tag = 'scoped memory for tpu_custom_call.1']
    #allocation5 [shape = 'u8[65536]{0}', space=vmem, size = 0x10000, scoped, tag = 'input window, operand 1, single buffered']
    #allocation6 [shape = 's32[1]{0}', space=sflag, size = 0x4, scoped, tag = 'scoped memory for tpu_custom_call.1']
    #allocation7 [shape = 'u8[262144]{0}', space=vmem, size = 0x40000, scoped, tag = 'output window, operand 0']
    %8 = vsyncpa [#allocation3], 0
    %s9 = scalar_lea.sflag [#allocation3], 1
    %10 = vsyncpa %s9, 0
    %11 = vsyncpa [#allocation6], 0
    %12 = vsyncpa [#allocation4], 0
    %s13 = scalar_lea.sflag [#allocation4], 1
    %14 = vsyncpa %s13, 0
    loop: start=0, step=1, limit=4
    $region2: #{tpu_custom_call.1} parent=1 // loop_pre_header
      _
    $region3: #{tpu_custom_call.1} parent=1 // loop_header
      %s16 = sphi 0, %s20
      %p17 = scmp.ge.s32.totalorder %s16, 4
      %s26 = sphi 0, %s28
      %s29 = sphi 0, %s26
      %s30 = sphi 0, %s29
      %s46 = sphi 0, %s30
      %s50 = sphi 0, %s50
      %s52 = sphi 0, %s50
      %s53 = sphi 0, %s52
      %s67 = sphi 0, %s53
      %s71 = sphi 0, %s71
      %s73 = sphi 0, %s71
      %s74 = sphi 0, %s73
      %s88 = sphi 0, %s74
      %s94 = sphi 0, %s96
      %s97 = sphi 0, %s94
      %s98 = sphi 0, %s97
      %s114 = sphi 0, %s98
    $region4: #{tpu_custom_call.1} parent=1 // loop_header_branch
      %19 = sbr.rel (%p17) target = $region8
    $region5: #{tpu_custom_call.1} parent=1 // loop_body
      %s21 = ssub.s32 %s16, 1
      %s22 = ssub.s32 %s16, 2
      %s23 = sadd.s32 %s16, 1
      %s24 = ssub.s32 %s16, %s23
      %p25 = scmp.eq.s32.totalorder %s24, 0
      %s27 = sadd.s32 %s26, 1
      %s28 = scalar_select %p25, %s26, %s27
      %p31 = pneg %p25
      %p32 = scmp.eq.s32.totalorder %s16, 1
      %p33 = por %p31, %p32
      %p34 = scmp.ne.s32.totalorder %s26, %s29
      %p35 = scmp.eq.s32.totalorder %s16, 0
      %p36 = por %p34, %p35
      %p37 = scmp.ne.s32.totalorder %s26, %s29
      %p38 = scmp.eq.s32.totalorder %s21, 1
      %p39 = por %p37, %p38
      %p40 = scmp.ne.s32.totalorder %s29, %s30
      %p41 = scmp.eq.s32.totalorder %s21, 0
      %p42 = por %p40, %p41
      %p43 = scmp.ne.s32.totalorder %s29, %s30
      %p44 = scmp.eq.s32.totalorder %s22, 1
      %p45 = por %p43, %p44
      %p47 = scmp.ne.s32.totalorder %s30, %s46
      %p48 = scmp.eq.s32.totalorder %s22, 0
      %p49 = por %p47, %p48
      %s51 = sadd.s32 %s50, 1
      %p54 = scmp.eq.s32.totalorder %s16, 1
      %p55 = scmp.ne.s32.totalorder %s50, %s52
      %p56 = scmp.eq.s32.totalorder %s16, 0
      %p57 = por %p55, %p56
      %p58 = scmp.ne.s32.totalorder %s50, %s52
      %p59 = scmp.eq.s32.totalorder %s21, 1
      %p60 = por %p58, %p59
      %p61 = scmp.ne.s32.totalorder %s52, %s53
      %p62 = scmp.eq.s32.totalorder %s21, 0
      %p63 = por %p61, %p62
      %p64 = scmp.ne.s32.totalorder %s52, %s53
      %p65 = scmp.eq.s32.totalorder %s22, 1
      %p66 = por %p64, %p65
      %p68 = scmp.ne.s32.totalorder %s53, %s67
      %p69 = scmp.eq.s32.totalorder %s22, 0
      %p70 = por %p68, %p69
      %s72 = sadd.s32 %s71, 1
      %p75 = scmp.eq.s32.totalorder %s16, 1
      %p76 = scmp.ne.s32.totalorder %s71, %s73
      %p77 = scmp.eq.s32.totalorder %s16, 0
      %p78 = por %p76, %p77
      %p79 = scmp.ne.s32.totalorder %s71, %s73
      %p80 = scmp.eq.s32.totalorder %s21, 1
      %p81 = por %p79, %p80
      %p82 = scmp.ne.s32.totalorder %s73, %s74
      %p83 = scmp.eq.s32.totalorder %s21, 0
      %p84 = por %p82, %p83
      %p85 = scmp.ne.s32.totalorder %s73, %s74
      %p86 = scmp.eq.s32.totalorder %s22, 1
      %p87 = por %p85, %p86
      %p89 = scmp.ne.s32.totalorder %s74, %s88
      %p90 = scmp.eq.s32.totalorder %s22, 0
      %p91 = por %p89, %p90
      %s92 = ssub.s32 %s16, %s23
      %p93 = scmp.eq.s32.totalorder %s92, 0
      %s95 = sadd.s32 %s94, 1
      %s96 = scalar_select %p93, %s94, %s95
      %p99 = pneg %p93
      %p100 = scmp.eq.s32.totalorder %s16, 1
      %p101 = por %p99, %p100
      %p102 = scmp.ne.s32.totalorder %s94, %s97
      %p103 = scmp.eq.s32.totalorder %s16, 0
      %p104 = por %p102, %p103
      %p105 = scmp.ne.s32.totalorder %s94, %s97
      %p106 = scmp.eq.s32.totalorder %s21, 1
      %p107 = por %p105, %p106
      %p108 = scmp.ne.s32.totalorder %s97, %s98
      %p109 = scmp.eq.s32.totalorder %s21, 0
      %p110 = por %p108, %p109
      %p111 = scmp.ne.s32.totalorder %s97, %s98
      %p112 = scmp.eq.s32.totalorder %s22, 1
      %p113 = por %p111, %p112
      %p115 = scmp.ne.s32.totalorder %s98, %s114
      %p116 = scmp.eq.s32.totalorder %s22, 0
      %p117 = por %p115, %p116
      %p118 = scmp.le.s32.totalorder 1, %s16
      %p119 = scmp.lt.s32.totalorder %s16, 3
      %p120 = pnand %p118, %p119
      %p121 = pneg %p120
      // Predicated region
      $region9: #{tpu_custom_call.1} parent=5 // pred_check
        _
      $region10: #{tpu_custom_call.1} parent=5 // pred_check_branch
        %123 = sbr.rel (%p120) target = $region12
      $region11: #{tpu_custom_call.1} parent=5 // pred_region
        %s124 = ssub.s32 %s16, 1
        // Predicated region
        $region13: #{tpu_custom_call.1} parent=11 // pred_check
          %p125 = pneg %p63
        $region14: #{tpu_custom_call.1} parent=11 // pred_check_branch
          %127 = sbr.rel (%p125) target = $region16
        $region15: #{tpu_custom_call.1} parent=11 // pred_region
          %s129 = ssub.s32 2048, 2048
          %130 = vsyncadd [#allocation6], %s129
          %s131 = sshll.u32 [#allocation5], 4
          %s132 = int_to_ptr.vmem [resolvable:$true] %s131
          %137 = dma.hbm_to_vmem [thread:$0]  %s1, 2048, %s132, [#allocation6], 128, 128, 8
        $region16: #{tpu_custom_call.1} parent=11 // pred_fallthru
          _
        // Predicated region
        $region17: #{tpu_custom_call.1} parent=11 // pred_check
          %p138 = pneg %p84
        $region18: #{tpu_custom_call.1} parent=11 // pred_check_branch
          %140 = sbr.rel (%p138) target = $region20
        $region19: #{tpu_custom_call.1} parent=11 // pred_region
          _
        $region20: #{tpu_custom_call.1} parent=11 // pred_fallthru
          _
      $region12: #{tpu_custom_call.1} parent=5 // pred_fallthru
        _
      %p141 = scmp.lt.s32.totalorder %s16, 2
      // Predicated region
      $region21: #{tpu_custom_call.1} parent=5 // pred_check
        %p142 = pneg %p141
      $region22: #{tpu_custom_call.1} parent=5 // pred_check_branch
        %144 = sbr.rel (%p142) target = $region24
      $region23: #{tpu_custom_call.1} parent=5 // pred_region
        // Predicated region
        $region25: #{tpu_custom_call.1} parent=23 // pred_check
          %p145 = pneg %p36
        $region26: #{tpu_custom_call.1} parent=23 // pred_check_branch
          %147 = sbr.rel (%p145) target = $region28
        $region27: #{tpu_custom_call.1} parent=23 // pred_region
          %s148 = sand.u32 %s26, 1
          %s149 = scalar_lea.sflag [#allocation3], %s148
          %s150 = sand.u32 %s26, 1
          %s151 = smul.addr %s150, 256
          %s152 = scalar_lea.vmem [#allocation2], %s151
          %s153 = smul.u32 32, %s16
          %s155 = ssub.s32 4096, 4096
          %156 = vsyncadd %s149, %s155
          %s157 = smul.addr %s153, 128
          %s158 = scalar_lea.hbm %s0, %s157
          %s159 = sshll.u32 %s152, 4
          %s160 = int_to_ptr.vmem [resolvable:$true] %s159
          %165 = dma.hbm_to_vmem [thread:$0]  %s158, 4096, %s160, %s149, 128, 128, 8
        $region28: #{tpu_custom_call.1} parent=23 // pred_fallthru
          _
      $region24: #{tpu_custom_call.1} parent=5 // pred_fallthru
        _
      %p166 = scmp.le.s32.totalorder 1, %s16
      %p167 = scmp.lt.s32.totalorder %s16, 3
      %p168 = pnand %p166, %p167
      %p169 = pneg %p168
      // Predicated region
      $region29: #{tpu_custom_call.1} parent=5 // pred_check
        _
      $region30: #{tpu_custom_call.1} parent=5 // pred_check_branch
        %171 = sbr.rel (%p168) target = $region32
      $region31: #{tpu_custom_call.1} parent=5 // pred_region
        %s172 = ssub.s32 %s16, 1
        %s173 = sand.u32 %s29, 1
        %s174 = scalar_lea.sflag [#allocation3], %s173
        %s175 = sand.u32 %s29, 1
        %s176 = smul.addr %s175, 256
        %s177 = scalar_lea.vmem [#allocation2], %s176
        // Predicated region
        $region33: #{tpu_custom_call.1} parent=31 // pred_check
          %p178 = pneg %p42
        $region34: #{tpu_custom_call.1} parent=31 // pred_check_branch
          %180 = sbr.rel (%p178) target = $region36
        $region35: #{tpu_custom_call.1} parent=31 // pred_region
          %181 = dma.done %s174, 4096
        $region36: #{tpu_custom_call.1} parent=31 // pred_fallthru
          _
        // Predicated region
        $region37: #{tpu_custom_call.1} parent=31 // pred_check
          %p182 = pneg %p63
        $region38: #{tpu_custom_call.1} parent=31 // pred_check_branch
          %184 = sbr.rel (%p182) target = $region40
        $region39: #{tpu_custom_call.1} parent=31 // pred_region
          %185 = dma.done [#allocation6], 2048
        $region40: #{tpu_custom_call.1} parent=31 // pred_fallthru
          _
        %s186 = sand.u32 %s29, 1
        %s187 = scalar_lea.sflag [#allocation3], %s186
        %s188 = sand.u32 %s29, 1
        %s189 = smul.addr %s188, 256
        %s190 = scalar_lea.vmem [#allocation2], %s189
        %p191 = pneg %p42
        %p192 = pneg %p39
        %p193 = pneg %p63
        %p194 = pneg %p60
        %p195 = pneg %p84
        %p196 = pneg %p81
        %p197 = pneg %p110
        %p198 = pneg %p107
        %s199 = sand.u32 %s97, 1
        %s200 = scalar_lea.sflag [#allocation4], %s199
        %s201 = sand.u32 %s97, 1
        %s202 = smul.addr %s201, 256
        %s203 = scalar_lea.vmem [#allocation7], %s202
        %s204 = smul.u32 32, %s21
        %s205 = smul.u32 32, %s21
        %v206 = vld [vmem:[%s177] sm:$0xff]
        %v207 = vld [vmem:[%s177 + $0x8] sm:$0xff]
        %v208 = vld [vmem:[%s177 + $0x10] sm:$0xff]
        %v209 = vld [vmem:[%s177 + $0x18] sm:$0xff]
        %v210 = vld [vmem:[%s177 + $0x20] sm:$0xff]
        %v211 = vld [vmem:[%s177 + $0x28] sm:$0xff]
        %v212 = vld [vmem:[%s177 + $0x30] sm:$0xff]
        %v213 = vld [vmem:[%s177 + $0x38] sm:$0xff]
        %v214 = vld [vmem:[%s177 + $0x40] sm:$0xff]
        %v215 = vld [vmem:[%s177 + $0x48] sm:$0xff]
        %v216 = vld [vmem:[%s177 + $0x50] sm:$0xff]
        %v217 = vld [vmem:[%s177 + $0x58] sm:$0xff]
        %v218 = vld [vmem:[%s177 + $0x60] sm:$0xff]
        %v219 = vld [vmem:[%s177 + $0x68] sm:$0xff]
        %v220 = vld [vmem:[%s177 + $0x70] sm:$0xff]
        %v221 = vld [vmem:[%s177 + $0x78] sm:$0xff]
        %v222 = vld [vmem:[%s177 + $0x80] sm:$0xff]
        %v223 = vld [vmem:[%s177 + $0x88] sm:$0xff]
        %v224 = vld [vmem:[%s177 + $0x90] sm:$0xff]
        %v225 = vld [vmem:[%s177 + $0x98] sm:$0xff]
        %v226 = vld [vmem:[%s177 + $0xa0] sm:$0xff]
        %v227 = vld [vmem:[%s177 + $0xa8] sm:$0xff]
        %v228 = vld [vmem:[%s177 + $0xb0] sm:$0xff]
        %v229 = vld [vmem:[%s177 + $0xb8] sm:$0xff]
        %v230 = vld [vmem:[%s177 + $0xc0] sm:$0xff]
        %v231 = vld [vmem:[%s177 + $0xc8] sm:$0xff]
        %v232 = vld [vmem:[%s177 + $0xd0] sm:$0xff]
        %v233 = vld [vmem:[%s177 + $0xd8] sm:$0xff]
        %v234 = vld [vmem:[%s177 + $0xe0] sm:$0xff]
        %v235 = vld [vmem:[%s177 + $0xe8] sm:$0xff]
        %v236 = vld [vmem:[%s177 + $0xf0] sm:$0xff]
        %v237 = vld [vmem:[%s177 + $0xf8] sm:$0xff]
        %v238 = vld [vmem:[#allocation5] sm:$0xff]
        %v239 = vld [vmem:[#allocation5 + $0x8] sm:$0xff]
        %v240 = vld [vmem:[#allocation5 + $0x10] sm:$0xff]
        %v241 = vld [vmem:[#allocation5 + $0x18] sm:$0xff]
        %v242 = vld [vmem:[#allocation5 + $0x20] sm:$0xff]
        %v243 = vld [vmem:[#allocation5 + $0x28] sm:$0xff]
        %v244 = vld [vmem:[#allocation5 + $0x30] sm:$0xff]
        %v245 = vld [vmem:[#allocation5 + $0x38] sm:$0xff]
        %v246 = vld [vmem:[#allocation5 + $0x40] sm:$0xff]
        %v247 = vld [vmem:[#allocation5 + $0x48] sm:$0xff]
        %v248 = vld [vmem:[#allocation5 + $0x50] sm:$0xff]
        %v249 = vld [vmem:[#allocation5 + $0x58] sm:$0xff]
        %v250 = vld [vmem:[#allocation5 + $0x60] sm:$0xff]
        %v251 = vld [vmem:[#allocation5 + $0x68] sm:$0xff]
        %v252 = vld [vmem:[#allocation5 + $0x70] sm:$0xff]
        %v253 = vld [vmem:[#allocation5 + $0x78] sm:$0xff]
        %v254 = vld [vmem:[%s2] sm:$0x1]
        %v256 = vlaneseq
        %v257 = vshrl.u32 %v256, 7
        %v258 = vsub.s32 0, %v257
        %v259 = vrot.slane %v254, %v258
        %261 = vmatprep.subr.mxu0 0.0
        %262 = vmatpush1.msra.mxu0 %v238
        %263 = vmatprep.subr.mxu0 0.0
        %264 = vmatpush1.msra.mxu0 %v239
        %265 = vmatprep.subr.mxu0 0.0
        %266 = vmatpush1.msra.mxu0 %v240
        %267 = vmatprep.subr.mxu0 0.0
        %268 = vmatpush1.msra.mxu0 %v241
        %269 = vmatprep.subr.mxu0 0.0
        %270 = vmatpush1.msra.mxu0 %v242
        %271 = vmatprep.subr.mxu0 0.0
        %272 = vmatpush1.msra.mxu0 %v243
        %273 = vmatprep.subr.mxu0 0.0
        %274 = vmatpush1.msra.mxu0 %v244
        %275 = vmatprep.subr.mxu0 0.0
        %276 = vmatpush1.msra.mxu0 %v245
        %277 = vmatprep.subr.mxu0 0.0
        %278 = vmatpush1.msra.mxu0 %v246
        %279 = vmatprep.subr.mxu0 0.0
        %280 = vmatpush1.msra.mxu0 %v247
        %281 = vmatprep.subr.mxu0 0.0
        %282 = vmatpush1.msra.mxu0 %v248
        %283 = vmatprep.subr.mxu0 0.0
        %284 = vmatpush1.msra.mxu0 %v249
        %285 = vmatprep.subr.mxu0 0.0
        %286 = vmatpush1.msra.mxu0 %v250
        %287 = vmatprep.subr.mxu0 0.0
        %288 = vmatpush1.msra.mxu0 %v251
        %289 = vmatprep.subr.mxu0 0.0
        %290 = vmatpush1.msra.mxu0 %v252
        %291 = vmatprep.subr.mxu0 0.0
        %292 = vmatpush1.msra.mxu0 %v253
        %293 = vmatprep.subr.mxu0 0.0
        %294 = vmatpush1.msra.mxu0 0.0
        %295 = vmatprep.subr.mxu0 0.0
        %296 = vmatpush1.msra.mxu0 0.0
        %297 = vmatprep.subr.mxu0 0.0
        %298 = vmatpush1.msra.mxu0 0.0
        %299 = vmatprep.subr.mxu0 0.0
        %300 = vmatpush1.msra.mxu0 0.0
        %301 = vmatprep.subr.mxu0 0.0
        %302 = vmatpush1.msra.mxu0 0.0
        %303 = vmatprep.subr.mxu0 0.0
        %304 = vmatpush1.msra.mxu0 0.0
        %305 = vmatprep.subr.mxu0 0.0
        %306 = vmatpush1.msra.mxu0 0.0
        %307 = vmatprep.subr.mxu0 0.0
        %308 = vmatpush1.msra.mxu0 0.0
        %309 = vmatprep.subr.mxu0 0.0
        %310 = vmatpush1.msra.mxu0 0.0
        %311 = vmatprep.subr.mxu0 0.0
        %312 = vmatpush1.msra.mxu0 0.0
        %313 = vmatprep.subr.mxu0 0.0
        %314 = vmatpush1.msra.mxu0 0.0
        %315 = vmatprep.subr.mxu0 0.0
        %316 = vmatpush1.msra.mxu0 0.0
        %317 = vmatprep.subr.mxu0 0.0
        %318 = vmatpush1.msra.mxu0 0.0
        %319 = vmatprep.subr.mxu0 0.0
        %320 = vmatpush1.msra.mxu0 0.0
        %321 = vmatprep.subr.mxu0 0.0
        %322 = vmatpush1.msra.mxu0 0.0
        %323 = vmatprep.subr.mxu0 0.0
        %324 = vmatpush1.msra.mxu0 0.0
        %325 = vmatprep.mubr.f32.mxu0 0.0
        %326 = vmatmul.mubr.f32.gmra.mrb[0].mxu0 %v206
        %v327 = vpop.f32.mrb[0].mxu0
        %v328 = vadd.f32 %v259, %v327
        %v329 = vpop.f32.mrb[0].mxu0
        %330 = vmatprep.mubr.f32.mxu0 0.0
        %331 = vmatmul.mubr.f32.gmra.mrb[0].mxu0 %v207
        %v332 = vpop.f32.mrb[0].mxu0
        %v333 = vadd.f32 %v259, %v332
        %v334 = vpop.f32.mrb[0].mxu0
        %335 = vmatprep.mubr.f32.mxu0 0.0
        %336 = vmatmul.mubr.f32.gmra.mrb[0].mxu0 %v208
        %v337 = vpop.f32.mrb[0].mxu0
        %v338 = vadd.f32 %v259, %v337
        %v339 = vpop.f32.mrb[0].mxu0
        %340 = vmatprep.mubr.f32.mxu0 0.0
        %341 = vmatmul.mubr.f32.gmra.mrb[0].mxu0 %v209
        %v342 = vpop.f32.mrb[0].mxu0
        %v343 = vadd.f32 %v259, %v342
        %v344 = vpop.f32.mrb[0].mxu0
        %345 = vmatprep.mubr.f32.mxu0 0.0
        %346 = vmatmul.mubr.f32.gmra.mrb[0].mxu0 %v210
        %v347 = vpop.f32.mrb[0].mxu0
        %v348 = vadd.f32 %v259, %v347
        %v349 = vpop.f32.mrb[0].mxu0
        %350 = vmatprep.mubr.f32.mxu0 0.0
        %351 = vmatmul.mubr.f32.gmra.mrb[0].mxu0 %v211
        %v352 = vpop.f32.mrb[0].mxu0
        %v353 = vadd.f32 %v259, %v352
        %v354 = vpop.f32.mrb[0].mxu0
        %355 = vmatprep.mubr.f32.mxu0 0.0
        %356 = vmatmul.mubr.f32.gmra.mrb[0].mxu0 %v212
        %v357 = vpop.f32.mrb[0].mxu0
        %v358 = vadd.f32 %v259, %v357
        %v359 = vpop.f32.mrb[0].mxu0
        %360 = vmatprep.mubr.f32.mxu0 0.0
        %361 = vmatmul.mubr.f32.gmra.mrb[0].mxu0 %v213
        %v362 = vpop.f32.mrb[0].mxu0
        %v363 = vadd.f32 %v259, %v362
        %v364 = vpop.f32.mrb[0].mxu0
        %365 = vmatprep.mubr.f32.mxu0 0.0
        %366 = vmatmul.mubr.f32.gmra.mrb[0].mxu0 %v214
        %v367 = vpop.f32.mrb[0].mxu0
        %v368 = vadd.f32 %v259, %v367
        %v369 = vpop.f32.mrb[0].mxu0
        %370 = vmatprep.mubr.f32.mxu0 0.0
        %371 = vmatmul.mubr.f32.gmra.mrb[0].mxu0 %v215
        %v372 = vpop.f32.mrb[0].mxu0
        %v373 = vadd.f32 %v259, %v372
        %v374 = vpop.f32.mrb[0].mxu0
        %375 = vmatprep.mubr.f32.mxu0 0.0
        %376 = vmatmul.mubr.f32.gmra.mrb[0].mxu0 %v216
        %v377 = vpop.f32.mrb[0].mxu0
        %v378 = vadd.f32 %v259, %v377
        %v379 = vpop.f32.mrb[0].mxu0
        %380 = vmatprep.mubr.f32.mxu0 0.0
        %381 = vmatmul.mubr.f32.gmra.mrb[0].mxu0 %v217
        %v382 = vpop.f32.mrb[0].mxu0
        %v383 = vadd.f32 %v259, %v382
        %v384 = vpop.f32.mrb[0].mxu0
        %385 = vmatprep.mubr.f32.mxu0 0.0
        %386 = vmatmul.mubr.f32.gmra.mrb[0].mxu0 %v218
        %v387 = vpop.f32.mrb[0].mxu0
        %v388 = vadd.f32 %v259, %v387
        %v389 = vpop.f32.mrb[0].mxu0
        %390 = vmatprep.mubr.f32.mxu0 0.0
        %391 = vmatmul.mubr.f32.gmra.mrb[0].mxu0 %v219
        %v392 = vpop.f32.mrb[0].mxu0
        %v393 = vadd.f32 %v259, %v392
        %v394 = vpop.f32.mrb[0].mxu0
        %395 = vmatprep.mubr.f32.mxu0 0.0
        %396 = vmatmul.mubr.f32.gmra.mrb[0].mxu0 %v220
        %v397 = vpop.f32.mrb[0].mxu0
        %v398 = vadd.f32 %v259, %v397
        %v399 = vpop.f32.mrb[0].mxu0
        %400 = vmatprep.mubr.f32.mxu0 0.0
        %401 = vmatmul.mubr.f32.gmra.mrb[0].mxu0 %v221
        %v402 = vpop.f32.mrb[0].mxu0
        %v403 = vadd.f32 %v259, %v402
        %v404 = vpop.f32.mrb[0].mxu0
        %405 = vmatprep.mubr.f32.mxu0 0.0
        %406 = vmatmul.mubr.f32.gmra.mrb[0].mxu0 %v222
        %v407 = vpop.f32.mrb[0].mxu0
        %v408 = vadd.f32 %v259, %v407
        %v409 = vpop.f32.mrb[0].mxu0
        %410 = vmatprep.mubr.f32.mxu0 0.0
        %411 = vmatmul.mubr.f32.gmra.mrb[0].mxu0 %v223
        %v412 = vpop.f32.mrb[0].mxu0
        %v413 = vadd.f32 %v259, %v412
        %v414 = vpop.f32.mrb[0].mxu0
        %415 = vmatprep.mubr.f32.mxu0 0.0
        %416 = vmatmul.mubr.f32.gmra.mrb[0].mxu0 %v224
        %v417 = vpop.f32.mrb[0].mxu0
        %v418 = vadd.f32 %v259, %v417
        %v419 = vpop.f32.mrb[0].mxu0
        %420 = vmatprep.mubr.f32.mxu0 0.0
        %421 = vmatmul.mubr.f32.gmra.mrb[0].mxu0 %v225
        %v422 = vpop.f32.mrb[0].mxu0
        %v423 = vadd.f32 %v259, %v422
        %v424 = vpop.f32.mrb[0].mxu0
        %425 = vmatprep.mubr.f32.mxu0 0.0
        %426 = vmatmul.mubr.f32.gmra.mrb[0].mxu0 %v226
        %v427 = vpop.f32.mrb[0].mxu0
        %v428 = vadd.f32 %v259, %v427
        %v429 = vpop.f32.mrb[0].mxu0
        %430 = vmatprep.mubr.f32.mxu0 0.0
        %431 = vmatmul.mubr.f32.gmra.mrb[0].mxu0 %v227
        %v432 = vpop.f32.mrb[0].mxu0
        %v433 = vadd.f32 %v259, %v432
        %v434 = vpop.f32.mrb[0].mxu0
        %435 = vmatprep.mubr.f32.mxu0 0.0
        %436 = vmatmul.mubr.f32.gmra.mrb[0].mxu0 %v228
        %v437 = vpop.f32.mrb[0].mxu0
        %v438 = vadd.f32 %v259, %v437
        %v439 = vpop.f32.mrb[0].mxu0
        %440 = vmatprep.mubr.f32.mxu0 0.0
        %441 = vmatmul.mubr.f32.gmra.mrb[0].mxu0 %v229
        %v442 = vpop.f32.mrb[0].mxu0
        %v443 = vadd.f32 %v259, %v442
        %v444 = vpop.f32.mrb[0].mxu0
        %445 = vmatprep.mubr.f32.mxu0 0.0
        %446 = vmatmul.mubr.f32.gmra.mrb[0].mxu0 %v230
        %v447 = vpop.f32.mrb[0].mxu0
        %v448 = vadd.f32 %v259, %v447
        %v449 = vpop.f32.mrb[0].mxu0
        %450 = vmatprep.mubr.f32.mxu0 0.0
        %451 = vmatmul.mubr.f32.gmra.mrb[0].mxu0 %v231
        %v452 = vpop.f32.mrb[0].mxu0
        %v453 = vadd.f32 %v259, %v452
        %v454 = vpop.f32.mrb[0].mxu0
        %455 = vmatprep.mubr.f32.mxu0 0.0
        %456 = vmatmul.mubr.f32.gmra.mrb[0].mxu0 %v232
        %v457 = vpop.f32.mrb[0].mxu0
        %v458 = vadd.f32 %v259, %v457
        %v459 = vpop.f32.mrb[0].mxu0
        %460 = vmatprep.mubr.f32.mxu0 0.0
        %461 = vmatmul.mubr.f32.gmra.mrb[0].mxu0 %v233
        %v462 = vpop.f32.mrb[0].mxu0
        %v463 = vadd.f32 %v259, %v462
        %v464 = vpop.f32.mrb[0].mxu0
        %465 = vmatprep.mubr.f32.mxu0 0.0
        %466 = vmatmul.mubr.f32.gmra.mrb[0].mxu0 %v234
        %v467 = vpop.f32.mrb[0].mxu0
        %v468 = vadd.f32 %v259, %v467
        %v469 = vpop.f32.mrb[0].mxu0
        %470 = vmatprep.mubr.f32.mxu0 0.0
        %471 = vmatmul.mubr.f32.gmra.mrb[0].mxu0 %v235
        %v472 = vpop.f32.mrb[0].mxu0
        %v473 = vadd.f32 %v259, %v472
        %v474 = vpop.f32.mrb[0].mxu0
        %475 = vmatprep.mubr.f32.mxu0 0.0
        %476 = vmatmul.mubr.f32.gmra.mrb[0].mxu0 %v236
        %v477 = vpop.f32.mrb[0].mxu0
        %v478 = vadd.f32 %v259, %v477
        %v479 = vpop.f32.mrb[0].mxu0
        %480 = vmatprep.mubr.f32.mxu0 0.0
        %481 = vmatmul.mubr.f32.gmra.mrb[0].mxu0 %v237
        %v482 = vpop.f32.mrb[0].mxu0
        %v483 = vadd.f32 %v259, %v482
        %v484 = vpop.f32.mrb[0].mxu0
        %485 = vdwg.mxu0
        %v486 = vsub.f32 0.0, %v328
        %v487 = vsub.f32 0.0, %v333
        %v488 = vsub.f32 0.0, %v338
        %v489 = vsub.f32 0.0, %v343
        %v490 = vsub.f32 0.0, %v348
        %v491 = vsub.f32 0.0, %v353
        %v492 = vsub.f32 0.0, %v358
        %v493 = vsub.f32 0.0, %v363
        %v494 = vsub.f32 0.0, %v368
        %v495 = vsub.f32 0.0, %v373
        %v496 = vsub.f32 0.0, %v378
        %v497 = vsub.f32 0.0, %v383
        %v498 = vsub.f32 0.0, %v388
        %v499 = vsub.f32 0.0, %v393
        %v500 = vsub.f32 0.0, %v398
        %v501 = vsub.f32 0.0, %v403
        %v502 = vsub.f32 0.0, %v408
        %v503 = vsub.f32 0.0, %v413
        %v504 = vsub.f32 0.0, %v418
        %v505 = vsub.f32 0.0, %v423
        %v506 = vsub.f32 0.0, %v428
        %v507 = vsub.f32 0.0, %v433
        %v508 = vsub.f32 0.0, %v438
        %v509 = vsub.f32 0.0, %v443
        %v510 = vsub.f32 0.0, %v448
        %v511 = vsub.f32 0.0, %v453
        %v512 = vsub.f32 0.0, %v458
        %v513 = vsub.f32 0.0, %v463
        %v514 = vsub.f32 0.0, %v468
        %v515 = vsub.f32 0.0, %v473
        %v516 = vsub.f32 0.0, %v478
        %v517 = vsub.f32 0.0, %v483
        %v518 = vmul.f32 %v486, 1.442695
        %v519 = vpow.pop %v518
        %v520 = vmul.f32 %v487, 1.442695
        %v521 = vpow.pop %v520
        %v522 = vmul.f32 %v488, 1.442695
        %v523 = vpow.pop %v522
        %v524 = vmul.f32 %v489, 1.442695
        %v525 = vpow.pop %v524
        %v526 = vmul.f32 %v490, 1.442695
        %v527 = vpow.pop %v526
        %v528 = vmul.f32 %v491, 1.442695
        %v529 = vpow.pop %v528
        %v530 = vmul.f32 %v492, 1.442695
        %v531 = vpow.pop %v530
        %v532 = vmul.f32 %v493, 1.442695
        %v533 = vpow.pop %v532
        %v534 = vmul.f32 %v494, 1.442695
        %v535 = vpow.pop %v534
        %v536 = vmul.f32 %v495, 1.442695
        %v537 = vpow.pop %v536
        %v538 = vmul.f32 %v496, 1.442695
        %v539 = vpow.pop %v538
        %v540 = vmul.f32 %v497, 1.442695
        %v541 = vpow.pop %v540
        %v542 = vmul.f32 %v498, 1.442695
        %v543 = vpow.pop %v542
        %v544 = vmul.f32 %v499, 1.442695
        %v545 = vpow.pop %v544
        %v546 = vmul.f32 %v500, 1.442695
        %v547 = vpow.pop %v546
        %v548 = vmul.f32 %v501, 1.442695
        %v549 = vpow.pop %v548
        %v550 = vmul.f32 %v502, 1.442695
        %v551 = vpow.pop %v550
        %v552 = vmul.f32 %v503, 1.442695
        %v553 = vpow.pop %v552
        %v554 = vmul.f32 %v504, 1.442695
        %v555 = vpow.pop %v554
        %v556 = vmul.f32 %v505, 1.442695
        %v557 = vpow.pop %v556
        %v558 = vmul.f32 %v506, 1.442695
        %v559 = vpow.pop %v558
        %v560 = vmul.f32 %v507, 1.442695
        %v561 = vpow.pop %v560
        %v562 = vmul.f32 %v508, 1.442695
        %v563 = vpow.pop %v562
        %v564 = vmul.f32 %v509, 1.442695
        %v565 = vpow.pop %v564
        %v566 = vmul.f32 %v510, 1.442695
        %v567 = vpow.pop %v566
        %v568 = vmul.f32 %v511, 1.442695
        %v569 = vpow.pop %v568
        %v570 = vmul.f32 %v512, 1.442695
        %v571 = vpow.pop %v570
        %v572 = vmul.f32 %v513, 1.442695
        %v573 = vpow.pop %v572
        %v574 = vmul.f32 %v514, 1.442695
        %v575 = vpow.pop %v574
        %v576 = vmul.f32 %v515, 1.442695
        %v577 = vpow.pop %v576
        %v578 = vmul.f32 %v516, 1.442695
        %v579 = vpow.pop %v578
        %v580 = vmul.f32 %v517, 1.442695
        %v581 = vpow.pop %v580
        %v582 = vadd.f32 %v519, 1.0
        %v583 = vadd.f32 %v521, 1.0
        %v584 = vadd.f32 %v523, 1.0
        %v585 = vadd.f32 %v525, 1.0
        %v586 = vadd.f32 %v527, 1.0
        %v587 = vadd.f32 %v529, 1.0
        %v588 = vadd.f32 %v531, 1.0
        %v589 = vadd.f32 %v533, 1.0
        %v590 = vadd.f32 %v535, 1.0
        %v591 = vadd.f32 %v537, 1.0
        %v592 = vadd.f32 %v539, 1.0
        %v593 = vadd.f32 %v541, 1.0
        %v594 = vadd.f32 %v543, 1.0
        %v595 = vadd.f32 %v545, 1.0
        %v596 = vadd.f32 %v547, 1.0
        %v597 = vadd.f32 %v549, 1.0
        %v598 = vadd.f32 %v551, 1.0
        %v599 = vadd.f32 %v553, 1.0
        %v600 = vadd.f32 %v555, 1.0
        %v601 = vadd.f32 %v557, 1.0
        %v602 = vadd.f32 %v559, 1.0
        %v603 = vadd.f32 %v561, 1.0
        %v604 = vadd.f32 %v563, 1.0
        %v605 = vadd.f32 %v565, 1.0
        %v606 = vadd.f32 %v567, 1.0
        %v607 = vadd.f32 %v569, 1.0
        %v608 = vadd.f32 %v571, 1.0
        %v609 = vadd.f32 %v573, 1.0
        %v610 = vadd.f32 %v575, 1.0
        %v611 = vadd.f32 %v577, 1.0
        %v612 = vadd.f32 %v579, 1.0
        %v613 = vadd.f32 %v581, 1.0
        %v614 = vrcp.pop %v582
        %v615 = vmul.f32 1.0, %v614
        %v616 = vrcp.pop %v583
        %v617 = vmul.f32 1.0, %v616
        %v618 = vrcp.pop %v584
        %v619 = vmul.f32 1.0, %v618
        %v620 = vrcp.pop %v585
        %v621 = vmul.f32 1.0, %v620
        %v622 = vrcp.pop %v586
        %v623 = vmul.f32 1.0, %v622
        %v624 = vrcp.pop %v587
        %v625 = vmul.f32 1.0, %v624
        %v626 = vrcp.pop %v588
        %v627 = vmul.f32 1.0, %v626
        %v628 = vrcp.pop %v589
        %v629 = vmul.f32 1.0, %v628
        %v630 = vrcp.pop %v590
        %v631 = vmul.f32 1.0, %v630
        %v632 = vrcp.pop %v591
        %v633 = vmul.f32 1.0, %v632
        %v634 = vrcp.pop %v592
        %v635 = vmul.f32 1.0, %v634
        %v636 = vrcp.pop %v593
        %v637 = vmul.f32 1.0, %v636
        %v638 = vrcp.pop %v594
        %v639 = vmul.f32 1.0, %v638
        %v640 = vrcp.pop %v595
        %v641 = vmul.f32 1.0, %v640
        %v642 = vrcp.pop %v596
        %v643 = vmul.f32 1.0, %v642
        %v644 = vrcp.pop %v597
        %v645 = vmul.f32 1.0, %v644
        %v646 = vrcp.pop %v598
        %v647 = vmul.f32 1.0, %v646
        %v648 = vrcp.pop %v599
        %v649 = vmul.f32 1.0, %v648
        %v650 = vrcp.pop %v600
        %v651 = vmul.f32 1.0, %v650
        %v652 = vrcp.pop %v601
        %v653 = vmul.f32 1.0, %v652
        %v654 = vrcp.pop %v602
        %v655 = vmul.f32 1.0, %v654
        %v656 = vrcp.pop %v603
        %v657 = vmul.f32 1.0, %v656
        %v658 = vrcp.pop %v604
        %v659 = vmul.f32 1.0, %v658
        %v660 = vrcp.pop %v605
        %v661 = vmul.f32 1.0, %v660
        %v662 = vrcp.pop %v606
        %v663 = vmul.f32 1.0, %v662
        %v664 = vrcp.pop %v607
        %v665 = vmul.f32 1.0, %v664
        %v666 = vrcp.pop %v608
        %v667 = vmul.f32 1.0, %v666
        %v668 = vrcp.pop %v609
        %v669 = vmul.f32 1.0, %v668
        %v670 = vrcp.pop %v610
        %v671 = vmul.f32 1.0, %v670
        %v672 = vrcp.pop %v611
        %v673 = vmul.f32 1.0, %v672
        %v674 = vrcp.pop %v612
        %v675 = vmul.f32 1.0, %v674
        %v676 = vrcp.pop %v613
        %v677 = vmul.f32 1.0, %v676
        %v678 = vmul.f32 %v328, %v615
        %v679 = vmul.f32 %v333, %v617
        %v680 = vmul.f32 %v338, %v619
        %v681 = vmul.f32 %v343, %v621
        %v682 = vmul.f32 %v348, %v623
        %v683 = vmul.f32 %v353, %v625
        %v684 = vmul.f32 %v358, %v627
        %v685 = vmul.f32 %v363, %v629
        %v686 = vmul.f32 %v368, %v631
        %v687 = vmul.f32 %v373, %v633
        %v688 = vmul.f32 %v378, %v635
        %v689 = vmul.f32 %v383, %v637
        %v690 = vmul.f32 %v388, %v639
        %v691 = vmul.f32 %v393, %v641
        %v692 = vmul.f32 %v398, %v643
        %v693 = vmul.f32 %v403, %v645
        %v694 = vmul.f32 %v408, %v647
        %v695 = vmul.f32 %v413, %v649
        %v696 = vmul.f32 %v418, %v651
        %v697 = vmul.f32 %v423, %v653
        %v698 = vmul.f32 %v428, %v655
        %v699 = vmul.f32 %v433, %v657
        %v700 = vmul.f32 %v438, %v659
        %v701 = vmul.f32 %v443, %v661
        %v702 = vmul.f32 %v448, %v663
        %v703 = vmul.f32 %v453, %v665
        %v704 = vmul.f32 %v458, %v667
        %v705 = vmul.f32 %v463, %v669
        %v706 = vmul.f32 %v468, %v671
        %v707 = vmul.f32 %v473, %v673
        %v708 = vmul.f32 %v478, %v675
        %v709 = vmul.f32 %v483, %v677
        %710 = vst [vmem:[%s203] sm:$0xff] %v678
        %711 = vst [vmem:[%s203 + $0x8] sm:$0xff] %v679
        %712 = vst [vmem:[%s203 + $0x10] sm:$0xff] %v680
        %713 = vst [vmem:[%s203 + $0x18] sm:$0xff] %v681
        %714 = vst [vmem:[%s203 + $0x20] sm:$0xff] %v682
        %715 = vst [vmem:[%s203 + $0x28] sm:$0xff] %v683
        %716 = vst [vmem:[%s203 + $0x30] sm:$0xff] %v684
        %717 = vst [vmem:[%s203 + $0x38] sm:$0xff] %v685
        %718 = vst [vmem:[%s203 + $0x40] sm:$0xff] %v686
        %719 = vst [vmem:[%s203 + $0x48] sm:$0xff] %v687
        %720 = vst [vmem:[%s203 + $0x50] sm:$0xff] %v688
        %721 = vst [vmem:[%s203 + $0x58] sm:$0xff] %v689
        %722 = vst [vmem:[%s203 + $0x60] sm:$0xff] %v690
        %723 = vst [vmem:[%s203 + $0x68] sm:$0xff] %v691
        %724 = vst [vmem:[%s203 + $0x70] sm:$0xff] %v692
        %725 = vst [vmem:[%s203 + $0x78] sm:$0xff] %v693
        %726 = vst [vmem:[%s203 + $0x80] sm:$0xff] %v694
        %727 = vst [vmem:[%s203 + $0x88] sm:$0xff] %v695
        %728 = vst [vmem:[%s203 + $0x90] sm:$0xff] %v696
        %729 = vst [vmem:[%s203 + $0x98] sm:$0xff] %v697
        %730 = vst [vmem:[%s203 + $0xa0] sm:$0xff] %v698
        %731 = vst [vmem:[%s203 + $0xa8] sm:$0xff] %v699
        %732 = vst [vmem:[%s203 + $0xb0] sm:$0xff] %v700
        %733 = vst [vmem:[%s203 + $0xb8] sm:$0xff] %v701
        %734 = vst [vmem:[%s203 + $0xc0] sm:$0xff] %v702
        %735 = vst [vmem:[%s203 + $0xc8] sm:$0xff] %v703
        %736 = vst [vmem:[%s203 + $0xd0] sm:$0xff] %v704
        %737 = vst [vmem:[%s203 + $0xd8] sm:$0xff] %v705
        %738 = vst [vmem:[%s203 + $0xe0] sm:$0xff] %v706
        %739 = vst [vmem:[%s203 + $0xe8] sm:$0xff] %v707
        %740 = vst [vmem:[%s203 + $0xf0] sm:$0xff] %v708
        %741 = vst [vmem:[%s203 + $0xf8] sm:$0xff] %v709
        %s742 = sand.u32 %s97, 1
        %s743 = scalar_lea.sflag [#allocation4], %s742
        %s744 = sand.u32 %s97, 1
        %s745 = smul.addr %s744, 256
        %s746 = scalar_lea.vmem [#allocation7], %s745
        // Predicated region
        $region41: #{tpu_custom_call.1} parent=31 // pred_check
          %p747 = pneg %p107
        $region42: #{tpu_custom_call.1} parent=31 // pred_check_branch
          %749 = sbr.rel (%p747) target = $region44
        $region43: #{tpu_custom_call.1} parent=31 // pred_region
          %s750 = smul.u32 32, %s21
          %s752 = ssub.s32 4096, 4096
          %753 = vsyncadd %s743, %s752
          %s754 = smul.addr %s750, 128
          %s755 = scalar_lea.hbm %s3, %s754
          %s756 = sshll.u32 %s746, 4
          %s757 = int_to_ptr.vmem [resolvable:$true] %s756
          %762 = dma.vmem_to_hbm [thread:$0]  %s757, 4096, %s755, %s743, 128, 128, 8
        $region44: #{tpu_custom_call.1} parent=31 // pred_fallthru
          _
      $region32: #{tpu_custom_call.1} parent=5 // pred_fallthru
        _
      %p763 = scmp.le.s32.totalorder 2, %s16
      // Predicated region
      $region45: #{tpu_custom_call.1} parent=5 // pred_check
        %p764 = pneg %p763
      $region46: #{tpu_custom_call.1} parent=5 // pred_check_branch
        %766 = sbr.rel (%p764) target = $region48
      $region47: #{tpu_custom_call.1} parent=5 // pred_region
        %s767 = ssub.s32 %s16, 2
        // Predicated region
        $region49: #{tpu_custom_call.1} parent=47 // pred_check
          %p768 = pneg %p113
        $region50: #{tpu_custom_call.1} parent=47 // pred_check_branch
          %770 = sbr.rel (%p768) target = $region52
        $region51: #{tpu_custom_call.1} parent=47 // pred_region
          %s771 = sand.u32 %s98, 1
          %s772 = scalar_lea.sflag [#allocation4], %s771
          %s773 = sand.u32 %s98, 1
          %s774 = smul.addr %s773, 256
          %s775 = scalar_lea.vmem [#allocation7], %s774
          %776 = dma.done %s772, 4096
        $region52: #{tpu_custom_call.1} parent=47 // pred_fallthru
          _
      $region48: #{tpu_custom_call.1} parent=5 // pred_fallthru
        _
    $region6: #{tpu_custom_call.1} parent=1 // loop_footer
      %s20 = sadd.s32 1, %s16
    $region7: #{tpu_custom_call.1} parent=1 // loop_footer_branch
      %15 = sbr.rel target = $region3
    $region8: #{tpu_custom_call.1} parent=1 // loop_exit
      _
    %777 = vsyncpa [#allocation3], 1
    %s778 = scalar_lea.sflag [#allocation3], 1
    %779 = vsyncpa %s778, 1
    %780 = vsyncpa [#allocation6], 1
    %781 = vsyncpa [#allocation4], 1
    %s782 = scalar_lea.sflag [#allocation4], 1
    %783 = vsyncpa %s782, 1

</llo_original>
